<compile_context>
chip_gen: v6e
topology: v6e:2x2x1
jax: 0.10.0
libtpu: 0.0.40
codegen_flags: <defaults>
</compile_context>

<pallas_src>
import math
from functools import partial

import numpy as np
import jax
import jax.numpy as jnp
from jax.experimental import pallas as pl
from jax.experimental.pallas import tpu as pltpu


# ----------------------- filter construction (glue, plain JAX) --------------

def _hz_to_mel(hz):
    return 2595.0 * np.log10(1.0 + hz / 700.0)


def _mel_to_hz(mel):
    return 700.0 * (10.0 ** (mel / 2595.0) - 1.0)


def make_sinc_params(out_channels, kernel_size, sample_rate=16000,
                     min_f1=50.0, min_band=50.0):
    """Deterministic parameter init, exactly mirroring sinc_Conv1d.__init__."""
    # left|center|right concat only yields a length-K filter for odd K.
    assert kernel_size % 2 == 1, "kernel_size must be odd"
    min_freq = 30.0
    max_freq = sample_rate / 2.0 - (min_f1 + min_band)
    freq_set_mel = np.linspace(_hz_to_mel(min_freq), _hz_to_mel(max_freq),
                               out_channels + 1)
    freq_set = _mel_to_hz(freq_set_mel)
    f1_param = jnp.asarray(freq_set[:-1], jnp.float32)[:, None]        # (C, 1)
    band_param = jnp.asarray(np.diff(freq_set), jnp.float32)[:, None]  # (C, 1)

    half = int(kernel_size / 2)
    n_lin = np.linspace(0.0, kernel_size / 2.0 - 1.0, half)
    window = jnp.asarray(0.54 - 0.46 * np.cos(2.0 * math.pi * n_lin / kernel_size),
                         jnp.float32)                                  # (K//2,)
    n = jnp.asarray(
        2.0 * math.pi * np.arange(-(kernel_size - 1) / 2.0, 0.0)[None, :]
        / sample_rate, jnp.float32)                                    # (1, K//2)
    return f1_param, band_param, n, window


def compute_filters(f1_param, band_param, n, window, *,
                    min_f1=50.0, min_band=50.0, sample_rate=16000):
    """Mirrors sinc_Conv1d.forward filter build + compute_kernel. -> (C, K)."""
    f1 = min_f1 + jnp.abs(f1_param)                                    # (C, 1)
    f2 = jnp.clip(f1 + min_band + jnp.abs(band_param),
                  min_f1, sample_rate / 2.0)                           # (C, 1)
    band = (f2 - f1)[:, 0]                                             # (C,)

    f_low = jnp.matmul(f1, n)                                          # (C, K//2)
    f_high = jnp.matmul(f2, n)                                         # (C, K//2)
    band_pass_left = (jnp.sin(f_high) - jnp.sin(f_low)) / (n / 2.0) * window
    band_pass_center = 2.0 * band[:, None]                             # (C, 1)
    band_pass_right = jnp.flip(band_pass_left, axis=1)
    band_pass = jnp.concatenate(
        [band_pass_left, band_pass_center, band_pass_right], axis=1)   # (C, K)
    return band_pass / (2.0 * band[:, None])


# ----------------------- Pallas conv1d kernel (hot path) --------------------

def _round_up(a, m):
    return (a + m - 1) // m * m


def _sinc_conv_kernel(cur_ref, halo_ref, w_ref, o_ref, xwin_ref, frames_ref, *,
                      K, K_pad, stride, dilation, tile_t, blk, halo_blk):
    # cur_ref   : (1, 1, blk)       current input block (auto-pipelined)
    # halo_ref  : (1, 1, halo_blk)  halo block starting at the next tile
    # w_ref     : (C_pad, K_pad)    zero-padded filters, resident in VMEM
    # o_ref     : (1, C_pad, tile_t) lane-dense output block
    # xwin_ref  : (1, blk + halo_blk) VMEM scratch — halo'd input window
    # frames_ref: (K_pad, tile_t)   VMEM scratch — im2col frame matrix

    # Assemble the halo'd window: [current block | halo]. Both stores are
    # full-width and lane-aligned (blk % 128 == 0, halo_blk % 128 == 0).
    xwin_ref[0, :blk] = cur_ref[0, 0, :]
    xwin_ref[0, blk:blk + halo_blk] = halo_ref[0, 0, :]

    # im2col: row k = input samples feeding filter tap k of every (strided)
    # output position in this tile.  Static unrolled row stores, reads come
    # straight from the VMEM ref (no large intermediate value slicing).
    for k in range(K):
        if stride == 1:
            sl = pl.ds(k * dilation, tile_t)
        else:
            sl = pl.ds(k * dilation, tile_t, stride=stride)
        frames_ref[k, :] = xwin_ref[0, sl]
    if K_pad > K:
        # padded contraction rows must be finite (their weights are exact 0s)
        frames_ref[K:K_pad, :] = jnp.zeros((K_pad - K, tile_t), jnp.float32)

    # One MXU matmul per tile: (C_pad, K_pad) @ (K_pad, tile_t), f32 acc.
    out = jnp.dot(w_ref[...], frames_ref[...],
                  preferred_element_type=jnp.float32)       # (C_pad, tile_t)
    o_ref[0] = out.astype(o_ref.dtype)


def sinc_conv1d(x, filters, *, stride=1, padding=0, dilation=1,
                max_tile_t=2048):
    """F.conv1d(x, filters[:, None, :]) with in_channels=1, bias=None.

    x: (N, 1, L) float32,  filters: (C_out, K) float32.
    Returns (N, C_out, L_out) float32 with the standard conv1d L_out.
    """
    B, c_in, L = x.shape
    assert c_in == 1, "sinc_Conv1d uses a single input channel"
    C, K = filters.shape

    L_out = (L + 2 * padding - dilation * (K - 1) - 1) // stride + 1
    assert L_out > 0, "input too short for this kernel/stride/dilation"

    # Halo needed beyond the current tile's input block, rounded to lanes.
    halo_len = max(dilation * (K - 1) + 1 - stride, 1)
    halo_blk = _round_up(halo_len, 128)

    # Lane-dense time tiling (multiple of 128), sized against a conservative
    # VMEM budget (double-buffered in/out blocks + scratch) so it fits the
    # 32 MiB scoped default on v5e/v6e and v7x's smaller VMEM.
    C_pad = _round_up(C, 8)
    K_pad = _round_up(K, 8)
    budget = 20 * 1024 * 1024
    per_t_bytes = 4 * (2 * C_pad + K_pad + 3 * stride)
    max_t_fit = max(128, (budget // per_t_bytes) // 128 * 128)
    tile_t = min(max_tile_t, max_t_fit, _round_up(L_out, 128))
    tile_t = _round_up(tile_t, halo_blk)     # so halo_blk divides tile_t*stride

    n_t = pl.cdiv(L_out, tile_t)
    T_pad = n_t * tile_t
    blk = tile_t * stride                    # input samples per output tile
    halo_step = blk // halo_blk              # halo block index stride

    w = jnp.zeros((C_pad, K_pad), jnp.float32).at[:C, :K].set(
        filters.astype(jnp.float32))

    # Zero-pad x so every main block and every halo block is fully in bounds.
    # The zeros double as the conv's `padding` and as tile-alignment tail.
    L_total = n_t * blk + halo_blk
    pad_left = padding
    pad_right = max(0, L_total - (L + pad_left))
    if pad_left or pad_right:
        x = jnp.pad(x, ((0, 0), (0, 0), (pad_left, pad_right)))

    out = pl.pallas_call(
        partial(_sinc_conv_kernel, K=K, K_pad=K_pad, stride=stride,
                dilation=dilation, tile_t=tile_t, blk=blk, halo_blk=halo_blk),
        out_shape=jax.ShapeDtypeStruct((B, C_pad, T_pad), jnp.float32),
        grid_spec=pltpu.PrefetchScalarGridSpec(
            num_scalar_prefetch=0,
            grid=(B, n_t),
            in_specs=[
                # current tile's input block
                pl.BlockSpec((1, 1, blk), lambda b, t: (b, 0, t)),
                # halo block: first halo_blk samples after the current block
                pl.BlockSpec((1, 1, halo_blk),
                             lambda b, t: (b, 0, (t + 1) * halo_step)),
                # filters (constant block index -> stays resident)
                pl.BlockSpec((C_pad, K_pad), lambda b, t: (0, 0)),
            ],
            out_specs=pl.BlockSpec((1, C_pad, tile_t), lambda b, t: (b, 0, t)),
            scratch_shapes=[
                pltpu.VMEM((1, blk + halo_blk), jnp.float32),  # halo'd window
                pltpu.VMEM((K_pad, tile_t), jnp.float32),      # im2col frames
            ],
        ),
        compiler_params=pltpu.CompilerParams(
            dimension_semantics=("parallel", "parallel")),
    )(x, x, w)

    # Crop channel / time padding (outputs beyond L_out came from zero pad).
    return out[:, :C, :L_out]


# ----------------------------- demo / check ---------------------------------

if __name__ == "__main__":
    out_channels = 10         # not a multiple of 8 -> exercises channel padding
    kernel_size = 33          # must be odd
    sample_rate = 16000
    batch, length = 2, 200    # small demo shapes

    # deterministic parameters (same init as the PyTorch module)
    f1_p, band_p, n, window = make_sinc_params(out_channels, kernel_size,
                                               sample_rate)
    filters = compute_filters(f1_p, band_p, n, window,
                              sample_rate=sample_rate)          # (C, K)

    # deterministic example input, PyTorch NCL layout (N, 1, L)
    key = jax.random.PRNGKey(0)
    x = jax.random.normal(key, (batch, 1, length), dtype=jnp.float32)

    # small max_tile_t so the demo exercises multiple time tiles + the halo
    out = sinc_conv1d(x, filters, stride=1, padding=0, dilation=1,
                      max_tile_t=128)
    out = jax.block_until_ready(out)

    ref = jax.lax.conv_general_dilated(
        x, filters[:, None, :], window_strides=(1,), padding="VALID",
        dimension_numbers=("NCH", "OIH", "NCH"))
    ref = jax.block_until_ready(ref)
    assert out.shape == (batch, out_channels, length - kernel_size + 1)
    assert np.allclose(np.asarray(out), np.asarray(ref), rtol=1e-3, atol=1e-3)

    # padding path (wrapper-side zero pad folded into the tiling pad)
    out_p = jax.block_until_ready(
        sinc_conv1d(x, filters, stride=1, padding=8, dilation=1,
                    max_tile_t=128))
    ref_p = jax.lax.conv_general_dilated(
        x, filters[:, None, :], window_strides=(1,), padding=[(8, 8)],
        dimension_numbers=("NCH", "OIH", "NCH"))
    assert np.allclose(np.asarray(out_p), np.asarray(ref_p),
                       rtol=1e-3, atol=1e-3)

    print("KERNEL_OK")
</pallas_src>

<mosaic_0001>
module attributes {stable_mosaic.version = 11 : i64} {
  func.func @_sinc_conv_kernel(%arg0: i32, %arg1: i32, %arg2: memref<1x1x128xf32, #tpu.memory_space<vmem>>, %arg3: memref<1x1x128xf32, #tpu.memory_space<vmem>>, %arg4: memref<16x40xf32, #tpu.memory_space<vmem>>, %arg5: memref<1x16x128xf32, #tpu.memory_space<vmem>>, %arg6: memref<1x256xf32, #tpu.memory_space<vmem>>, %arg7: memref<40x128xf32, #tpu.memory_space<vmem>>) attributes {dimension_semantics = [#tpu.dimension_semantics<parallel>, #tpu.dimension_semantics<parallel>], iteration_bounds = array<i64: 2, 2>, scalar_prefetch = 0 : i64, scratch_operands = 2 : i64, tpu.core_type = #tpu.core_type<tc>, window_params = [{transform_indices = @transform_0, window_bounds = array<i64: 1, 1, 128>}, {transform_indices = @transform_1, window_bounds = array<i64: 1, 1, 128>}, {pipeline_mode = #tpu.pipeline_mode<synchronous>, transform_indices = @transform_2, window_bounds = array<i64: 16, 40>}, {transform_indices = @transform_3, window_bounds = array<i64: 1, 16, 128>}]} {
    %c0 = arith.constant 0 : index
    %c0_0 = arith.constant 0 : index
    %c0_1 = arith.constant 0 : index
    %0 = vector.load %arg2[%c0, %c0_0, %c0_1] : memref<1x1x128xf32, #tpu.memory_space<vmem>>, vector<1x1x128xf32>
    %1 = vector.shape_cast %0 : vector<1x1x128xf32> to vector<128xf32>
    %c0_2 = arith.constant 0 : index
    %c0_3 = arith.constant 0 : index
    %2 = vector.load %arg6[%c0_2, %c0_3] : memref<1x256xf32, #tpu.memory_space<vmem>>, vector<1x128xf32>
    %3 = vector.shape_cast %2 : vector<1x128xf32> to vector<128xf32>
    %4 = vector.shape_cast %1 : vector<128xf32> to vector<1x128xf32>
    tpu.vector_store %arg6[%c0_2, %c0_3], %4 {strides = array<i32>} : memref<1x256xf32, #tpu.memory_space<vmem>>, vector<1x128xf32>,
    %c0_4 = arith.constant 0 : index
    %c0_5 = arith.constant 0 : index
    %c0_6 = arith.constant 0 : index
    %5 = vector.load %arg3[%c0_4, %c0_5, %c0_6] : memref<1x1x128xf32, #tpu.memory_space<vmem>>, vector<1x1x128xf32>
    %6 = vector.shape_cast %5 : vector<1x1x128xf32> to vector<128xf32>
    %c0_7 = arith.constant 0 : index
    %c128 = arith.constant 128 : index
    %7 = vector.load %arg6[%c0_7, %c128] : memref<1x256xf32, #tpu.memory_space<vmem>>, vector<1x128xf32>
    %8 = vector.shape_cast %7 : vector<1x128xf32> to vector<128xf32>
    %9 = vector.shape_cast %6 : vector<128xf32> to vector<1x128xf32>
    tpu.vector_store %arg6[%c0_7, %c128], %9 {strides = array<i32>} : memref<1x256xf32, #tpu.memory_space<vmem>>, vector<1x128xf32>,
    %c0_8 = arith.constant 0 : index
    %c0_9 = arith.constant 0 : index
    %10 = vector.load %arg6[%c0_8, %c0_9] : memref<1x256xf32, #tpu.memory_space<vmem>>, vector<1x128xf32>
    %11 = vector.shape_cast %10 : vector<1x128xf32> to vector<128xf32>
    %c0_10 = arith.constant 0 : index
    %c0_11 = arith.constant 0 : index
    %12 = vector.load %arg7[%c0_10, %c0_11] : memref<40x128xf32, #tpu.memory_space<vmem>>, vector<1x128xf32>
    %13 = vector.shape_cast %12 : vector<1x128xf32> to vector<128xf32>
    %14 = vector.shape_cast %11 : vector<128xf32> to vector<1x128xf32>
    tpu.vector_store %arg7[%c0_10, %c0_11], %14 {strides = array<i32>} : memref<40x128xf32, #tpu.memory_space<vmem>>, vector<1x128xf32>,
    %c0_12 = arith.constant 0 : index
    %c1 = arith.constant 1 : index
    %15 = vector.load %arg6[%c0_12, %c1] : memref<1x256xf32, #tpu.memory_space<vmem>>, vector<1x128xf32>
    %16 = vector.shape_cast %15 : vector<1x128xf32> to vector<128xf32>
    %c1_13 = arith.constant 1 : index
    %c0_14 = arith.constant 0 : index
    %17 = vector.load %arg7[%c1_13, %c0_14] : memref<40x128xf32, #tpu.memory_space<vmem>>, vector<1x128xf32>
    %18 = vector.shape_cast %17 : vector<1x128xf32> to vector<128xf32>
    %19 = vector.shape_cast %16 : vector<128xf32> to vector<1x128xf32>
    tpu.vector_store %arg7[%c1_13, %c0_14], %19 {strides = array<i32>} : memref<40x128xf32, #tpu.memory_space<vmem>>, vector<1x128xf32>,
    %c0_15 = arith.constant 0 : index
    %c2 = arith.constant 2 : index
    %20 = vector.load %arg6[%c0_15, %c2] : memref<1x256xf32, #tpu.memory_space<vmem>>, vector<1x128xf32>
    %21 = vector.shape_cast %20 : vector<1x128xf32> to vector<128xf32>
    %c2_16 = arith.constant 2 : index
    %c0_17 = arith.constant 0 : index
    %22 = vector.load %arg7[%c2_16, %c0_17] : memref<40x128xf32, #tpu.memory_space<vmem>>, vector<1x128xf32>
    %23 = vector.shape_cast %22 : vector<1x128xf32> to vector<128xf32>
    %24 = vector.shape_cast %21 : vector<128xf32> to vector<1x128xf32>
    tpu.vector_store %arg7[%c2_16, %c0_17], %24 {strides = array<i32>} : memref<40x128xf32, #tpu.memory_space<vmem>>, vector<1x128xf32>,
    %c0_18 = arith.constant 0 : index
    %c3 = arith.constant 3 : index
    %25 = vector.load %arg6[%c0_18, %c3] : memref<1x256xf32, #tpu.memory_space<vmem>>, vector<1x128xf32>
    %26 = vector.shape_cast %25 : vector<1x128xf32> to vector<128xf32>
    %c3_19 = arith.constant 3 : index
    %c0_20 = arith.constant 0 : index
    %27 = vector.load %arg7[%c3_19, %c0_20] : memref<40x128xf32, #tpu.memory_space<vmem>>, vector<1x128xf32>
    %28 = vector.shape_cast %27 : vector<1x128xf32> to vector<128xf32>
    %29 = vector.shape_cast %26 : vector<128xf32> to vector<1x128xf32>
    tpu.vector_store %arg7[%c3_19, %c0_20], %29 {strides = array<i32>} : memref<40x128xf32, #tpu.memory_space<vmem>>, vector<1x128xf32>,
    %c0_21 = arith.constant 0 : index
    %c4 = arith.constant 4 : index
    %30 = vector.load %arg6[%c0_21, %c4] : memref<1x256xf32, #tpu.memory_space<vmem>>, vector<1x128xf32>
    %31 = vector.shape_cast %30 : vector<1x128xf32> to vector<128xf32>
    %c4_22 = arith.constant 4 : index
    %c0_23 = arith.constant 0 : index
    %32 = vector.load %arg7[%c4_22, %c0_23] : memref<40x128xf32, #tpu.memory_space<vmem>>, vector<1x128xf32>
    %33 = vector.shape_cast %32 : vector<1x128xf32> to vector<128xf32>
    %34 = vector.shape_cast %31 : vector<128xf32> to vector<1x128xf32>
    tpu.vector_store %arg7[%c4_22, %c0_23], %34 {strides = array<i32>} : memref<40x128xf32, #tpu.memory_space<vmem>>, vector<1x128xf32>,
    %c0_24 = arith.constant 0 : index
    %c5 = arith.constant 5 : index
    %35 = vector.load %arg6[%c0_24, %c5] : memref<1x256xf32, #tpu.memory_space<vmem>>, vector<1x128xf32>
    %36 = vector.shape_cast %35 : vector<1x128xf32> to vector<128xf32>
    %c5_25 = arith.constant 5 : index
    %c0_26 = arith.constant 0 : index
    %37 = vector.load %arg7[%c5_25, %c0_26] : memref<40x128xf32, #tpu.memory_space<vmem>>, vector<1x128xf32>
    %38 = vector.shape_cast %37 : vector<1x128xf32> to vector<128xf32>
    %39 = vector.shape_cast %36 : vector<128xf32> to vector<1x128xf32>
    tpu.vector_store %arg7[%c5_25, %c0_26], %39 {strides = array<i32>} : memref<40x128xf32, #tpu.memory_space<vmem>>, vector<1x128xf32>,
    %c0_27 = arith.constant 0 : index
    %c6 = arith.constant 6 : index
    %40 = vector.load %arg6[%c0_27, %c6] : memref<1x256xf32, #tpu.memory_space<vmem>>, vector<1x128xf32>
    %41 = vector.shape_cast %40 : vector<1x128xf32> to vector<128xf32>
    %c6_28 = arith.constant 6 : index
    %c0_29 = arith.constant 0 : index
    %42 = vector.load %arg7[%c6_28, %c0_29] : memref<40x128xf32, #tpu.memory_space<vmem>>, vector<1x128xf32>
    %43 = vector.shape_cast %42 : vector<1x128xf32> to vector<128xf32>
    %44 = vector.shape_cast %41 : vector<128xf32> to vector<1x128xf32>
    tpu.vector_store %arg7[%c6_28, %c0_29], %44 {strides = array<i32>} : memref<40x128xf32, #tpu.memory_space<vmem>>, vector<1x128xf32>,
    %c0_30 = arith.constant 0 : index
    %c7 = arith.constant 7 : index
    %45 = vector.load %arg6[%c0_30, %c7] : memref<1x256xf32, #tpu.memory_space<vmem>>, vector<1x128xf32>
    %46 = vector.shape_cast %45 : vector<1x128xf32> to vector<128xf32>
    %c7_31 = arith.constant 7 : index
    %c0_32 = arith.constant 0 : index
    %47 = vector.load %arg7[%c7_31, %c0_32] : memref<40x128xf32, #tpu.memory_space<vmem>>, vector<1x128xf32>
    %48 = vector.shape_cast %47 : vector<1x128xf32> to vector<128xf32>
    %49 = vector.shape_cast %46 : vector<128xf32> to vector<1x128xf32>
    tpu.vector_store %arg7[%c7_31, %c0_32], %49 {strides = array<i32>} : memref<40x128xf32, #tpu.memory_space<vmem>>, vector<1x128xf32>,
    %c0_33 = arith.constant 0 : index
    %c8 = arith.constant 8 : index
    %50 = vector.load %arg6[%c0_33, %c8] : memref<1x256xf32, #tpu.memory_space<vmem>>, vector<1x128xf32>
    %51 = vector.shape_cast %50 : vector<1x128xf32> to vector<128xf32>
    %c8_34 = arith.constant 8 : index
    %c0_35 = arith.constant 0 : index
    %52 = vector.load %arg7[%c8_34, %c0_35] : memref<40x128xf32, #tpu.memory_space<vmem>>, vector<1x128xf32>
    %53 = vector.shape_cast %52 : vector<1x128xf32> to vector<128xf32>
    %54 = vector.shape_cast %51 : vector<128xf32> to vector<1x128xf32>
    tpu.vector_store %arg7[%c8_34, %c0_35], %54 {strides = array<i32>} : memref<40x128xf32, #tpu.memory_space<vmem>>, vector<1x128xf32>,
    %c0_36 = arith.constant 0 : index
    %c9 = arith.constant 9 : index
    %55 = vector.load %arg6[%c0_36, %c9] : memref<1x256xf32, #tpu.memory_space<vmem>>, vector<1x128xf32>
    %56 = vector.shape_cast %55 : vector<1x128xf32> to vector<128xf32>
    %c9_37 = arith.constant 9 : index
    %c0_38 = arith.constant 0 : index
    %57 = vector.load %arg7[%c9_37, %c0_38] : memref<40x128xf32, #tpu.memory_space<vmem>>, vector<1x128xf32>
    %58 = vector.shape_cast %57 : vector<1x128xf32> to vector<128xf32>
    %59 = vector.shape_cast %56 : vector<128xf32> to vector<1x128xf32>
    tpu.vector_store %arg7[%c9_37, %c0_38], %59 {strides = array<i32>} : memref<40x128xf32, #tpu.memory_space<vmem>>, vector<1x128xf32>,
    %c0_39 = arith.constant 0 : index
    %c10 = arith.constant 10 : index
    %60 = vector.load %arg6[%c0_39, %c10] : memref<1x256xf32, #tpu.memory_space<vmem>>, vector<1x128xf32>
    %61 = vector.shape_cast %60 : vector<1x128xf32> to vector<128xf32>
    %c10_40 = arith.constant 10 : index
    %c0_41 = arith.constant 0 : index
    %62 = vector.load %arg7[%c10_40, %c0_41] : memref<40x128xf32, #tpu.memory_space<vmem>>, vector<1x128xf32>
    %63 = vector.shape_cast %62 : vector<1x128xf32> to vector<128xf32>
    %64 = vector.shape_cast %61 : vector<128xf32> to vector<1x128xf32>
    tpu.vector_store %arg7[%c10_40, %c0_41], %64 {strides = array<i32>} : memref<40x128xf32, #tpu.memory_space<vmem>>, vector<1x128xf32>,
    %c0_42 = arith.constant 0 : index
    %c11 = arith.constant 11 : index
    %65 = vector.load %arg6[%c0_42, %c11] : memref<1x256xf32, #tpu.memory_space<vmem>>, vector<1x128xf32>
    %66 = vector.shape_cast %65 : vector<1x128xf32> to vector<128xf32>
    %c11_43 = arith.constant 11 : index
    %c0_44 = arith.constant 0 : index
    %67 = vector.load %arg7[%c11_43, %c0_44] : memref<40x128xf32, #tpu.memory_space<vmem>>, vector<1x128xf32>
    %68 = vector.shape_cast %67 : vector<1x128xf32> to vector<128xf32>
    %69 = vector.shape_cast %66 : vector<128xf32> to vector<1x128xf32>
    tpu.vector_store %arg7[%c11_43, %c0_44], %69 {strides = array<i32>} : memref<40x128xf32, #tpu.memory_space<vmem>>, vector<1x128xf32>,
    %c0_45 = arith.constant 0 : index
    %c12 = arith.constant 12 : index
    %70 = vector.load %arg6[%c0_45, %c12] : memref<1x256xf32, #tpu.memory_space<vmem>>, vector<1x128xf32>
    %71 = vector.shape_cast %70 : vector<1x128xf32> to vector<128xf32>
    %c12_46 = arith.constant 12 : index
    %c0_47 = arith.constant 0 : index
    %72 = vector.load %arg7[%c12_46, %c0_47] : memref<40x128xf32, #tpu.memory_space<vmem>>, vector<1x128xf32>
    %73 = vector.shape_cast %72 : vector<1x128xf32> to vector<128xf32>
    %74 = vector.shape_cast %71 : vector<128xf32> to vector<1x128xf32>
    tpu.vector_store %arg7[%c12_46, %c0_47], %74 {strides = array<i32>} : memref<40x128xf32, #tpu.memory_space<vmem>>, vector<1x128xf32>,
    %c0_48 = arith.constant 0 : index
    %c13 = arith.constant 13 : index
    %75 = vector.load %arg6[%c0_48, %c13] : memref<1x256xf32, #tpu.memory_space<vmem>>, vector<1x128xf32>
    %76 = vector.shape_cast %75 : vector<1x128xf32> to vector<128xf32>
    %c13_49 = arith.constant 13 : index
    %c0_50 = arith.constant 0 : index
    %77 = vector.load %arg7[%c13_49, %c0_50] : memref<40x128xf32, #tpu.memory_space<vmem>>, vector<1x128xf32>
    %78 = vector.shape_cast %77 : vector<1x128xf32> to vector<128xf32>
    %79 = vector.shape_cast %76 : vector<128xf32> to vector<1x128xf32>
    tpu.vector_store %arg7[%c13_49, %c0_50], %79 {strides = array<i32>} : memref<40x128xf32, #tpu.memory_space<vmem>>, vector<1x128xf32>,
    %c0_51 = arith.constant 0 : index
    %c14 = arith.constant 14 : index
    %80 = vector.load %arg6[%c0_51, %c14] : memref<1x256xf32, #tpu.memory_space<vmem>>, vector<1x128xf32>
    %81 = vector.shape_cast %80 : vector<1x128xf32> to vector<128xf32>
    %c14_52 = arith.constant 14 : index
    %c0_53 = arith.constant 0 : index
    %82 = vector.load %arg7[%c14_52, %c0_53] : memref<40x128xf32, #tpu.memory_space<vmem>>, vector<1x128xf32>
    %83 = vector.shape_cast %82 : vector<1x128xf32> to vector<128xf32>
    %84 = vector.shape_cast %81 : vector<128xf32> to vector<1x128xf32>
    tpu.vector_store %arg7[%c14_52, %c0_53], %84 {strides = array<i32>} : memref<40x128xf32, #tpu.memory_space<vmem>>, vector<1x128xf32>,
    %c0_54 = arith.constant 0 : index
    %c15 = arith.constant 15 : index
    %85 = vector.load %arg6[%c0_54, %c15] : memref<1x256xf32, #tpu.memory_space<vmem>>, vector<1x128xf32>
    %86 = vector.shape_cast %85 : vector<1x128xf32> to vector<128xf32>
    %c15_55 = arith.constant 15 : index
    %c0_56 = arith.constant 0 : index
    %87 = vector.load %arg7[%c15_55, %c0_56] : memref<40x128xf32, #tpu.memory_space<vmem>>, vector<1x128xf32>
    %88 = vector.shape_cast %87 : vector<1x128xf32> to vector<128xf32>
    %89 = vector.shape_cast %86 : vector<128xf32> to vector<1x128xf32>
    tpu.vector_store %arg7[%c15_55, %c0_56], %89 {strides = array<i32>} : memref<40x128xf32, #tpu.memory_space<vmem>>, vector<1x128xf32>,
    %c0_57 = arith.constant 0 : index
    %c16 = arith.constant 16 : index
    %90 = vector.load %arg6[%c0_57, %c16] : memref<1x256xf32, #tpu.memory_space<vmem>>, vector<1x128xf32>
    %91 = vector.shape_cast %90 : vector<1x128xf32> to vector<128xf32>
    %c16_58 = arith.constant 16 : index
    %c0_59 = arith.constant 0 : index
    %92 = vector.load %arg7[%c16_58, %c0_59] : memref<40x128xf32, #tpu.memory_space<vmem>>, vector<1x128xf32>
    %93 = vector.shape_cast %92 : vector<1x128xf32> to vector<128xf32>
    %94 = vector.shape_cast %91 : vector<128xf32> to vector<1x128xf32>
    tpu.vector_store %arg7[%c16_58, %c0_59], %94 {strides = array<i32>} : memref<40x128xf32, #tpu.memory_space<vmem>>, vector<1x128xf32>,
    %c0_60 = arith.constant 0 : index
    %c17 = arith.constant 17 : index
    %95 = vector.load %arg6[%c0_60, %c17] : memref<1x256xf32, #tpu.memory_space<vmem>>, vector<1x128xf32>
    %96 = vector.shape_cast %95 : vector<1x128xf32> to vector<128xf32>
    %c17_61 = arith.constant 17 : index
    %c0_62 = arith.constant 0 : index
    %97 = vector.load %arg7[%c17_61, %c0_62] : memref<40x128xf32, #tpu.memory_space<vmem>>, vector<1x128xf32>
    %98 = vector.shape_cast %97 : vector<1x128xf32> to vector<128xf32>
    %99 = vector.shape_cast %96 : vector<128xf32> to vector<1x128xf32>
    tpu.vector_store %arg7[%c17_61, %c0_62], %99 {strides = array<i32>} : memref<40x128xf32, #tpu.memory_space<vmem>>, vector<1x128xf32>,
    %c0_63 = arith.constant 0 : index
    %c18 = arith.constant 18 : index
    %100 = vector.load %arg6[%c0_63, %c18] : memref<1x256xf32, #tpu.memory_space<vmem>>, vector<1x128xf32>
    %101 = vector.shape_cast %100 : vector<1x128xf32> to vector<128xf32>
    %c18_64 = arith.constant 18 : index
    %c0_65 = arith.constant 0 : index
    %102 = vector.load %arg7[%c18_64, %c0_65] : memref<40x128xf32, #tpu.memory_space<vmem>>, vector<1x128xf32>
    %103 = vector.shape_cast %102 : vector<1x128xf32> to vector<128xf32>
    %104 = vector.shape_cast %101 : vector<128xf32> to vector<1x128xf32>
    tpu.vector_store %arg7[%c18_64, %c0_65], %104 {strides = array<i32>} : memref<40x128xf32, #tpu.memory_space<vmem>>, vector<1x128xf32>,
    %c0_66 = arith.constant 0 : index
    %c19 = arith.constant 19 : index
    %105 = vector.load %arg6[%c0_66, %c19] : memref<1x256xf32, #tpu.memory_space<vmem>>, vector<1x128xf32>
    %106 = vector.shape_cast %105 : vector<1x128xf32> to vector<128xf32>
    %c19_67 = arith.constant 19 : index
    %c0_68 = arith.constant 0 : index
    %107 = vector.load %arg7[%c19_67, %c0_68] : memref<40x128xf32, #tpu.memory_space<vmem>>, vector<1x128xf32>
    %108 = vector.shape_cast %107 : vector<1x128xf32> to vector<128xf32>
    %109 = vector.shape_cast %106 : vector<128xf32> to vector<1x128xf32>
    tpu.vector_store %arg7[%c19_67, %c0_68], %109 {strides = array<i32>} : memref<40x128xf32, #tpu.memory_space<vmem>>, vector<1x128xf32>,
    %c0_69 = arith.constant 0 : index
    %c20 = arith.constant 20 : index
    %110 = vector.load %arg6[%c0_69, %c20] : memref<1x256xf32, #tpu.memory_space<vmem>>, vector<1x128xf32>
    %111 = vector.shape_cast %110 : vector<1x128xf32> to vector<128xf32>
    %c20_70 = arith.constant 20 : index
    %c0_71 = arith.constant 0 : index
    %112 = vector.load %arg7[%c20_70, %c0_71] : memref<40x128xf32, #tpu.memory_space<vmem>>, vector<1x128xf32>
    %113 = vector.shape_cast %112 : vector<1x128xf32> to vector<128xf32>
    %114 = vector.shape_cast %111 : vector<128xf32> to vector<1x128xf32>
    tpu.vector_store %arg7[%c20_70, %c0_71], %114 {strides = array<i32>} : memref<40x128xf32, #tpu.memory_space<vmem>>, vector<1x128xf32>,
    %c0_72 = arith.constant 0 : index
    %c21 = arith.constant 21 : index
    %115 = vector.load %arg6[%c0_72, %c21] : memref<1x256xf32, #tpu.memory_space<vmem>>, vector<1x128xf32>
    %116 = vector.shape_cast %115 : vector<1x128xf32> to vector<128xf32>
    %c21_73 = arith.constant 21 : index
    %c0_74 = arith.constant 0 : index
    %117 = vector.load %arg7[%c21_73, %c0_74] : memref<40x128xf32, #tpu.memory_space<vmem>>, vector<1x128xf32>
    %118 = vector.shape_cast %117 : vector<1x128xf32> to vector<128xf32>
    %119 = vector.shape_cast %116 : vector<128xf32> to vector<1x128xf32>
    tpu.vector_store %arg7[%c21_73, %c0_74], %119 {strides = array<i32>} : memref<40x128xf32, #tpu.memory_space<vmem>>, vector<1x128xf32>,
    %c0_75 = arith.constant 0 : index
    %c22 = arith.constant 22 : index
    %120 = vector.load %arg6[%c0_75, %c22] : memref<1x256xf32, #tpu.memory_space<vmem>>, vector<1x128xf32>
    %121 = vector.shape_cast %120 : vector<1x128xf32> to vector<128xf32>
    %c22_76 = arith.constant 22 : index
    %c0_77 = arith.constant 0 : index
    %122 = vector.load %arg7[%c22_76, %c0_77] : memref<40x128xf32, #tpu.memory_space<vmem>>, vector<1x128xf32>
    %123 = vector.shape_cast %122 : vector<1x128xf32> to vector<128xf32>
    %124 = vector.shape_cast %121 : vector<128xf32> to vector<1x128xf32>
    tpu.vector_store %arg7[%c22_76, %c0_77], %124 {strides = array<i32>} : memref<40x128xf32, #tpu.memory_space<vmem>>, vector<1x128xf32>,
    %c0_78 = arith.constant 0 : index
    %c23 = arith.constant 23 : index
    %125 = vector.load %arg6[%c0_78, %c23] : memref<1x256xf32, #tpu.memory_space<vmem>>, vector<1x128xf32>
    %126 = vector.shape_cast %125 : vector<1x128xf32> to vector<128xf32>
    %c23_79 = arith.constant 23 : index
    %c0_80 = arith.constant 0 : index
    %127 = vector.load %arg7[%c23_79, %c0_80] : memref<40x128xf32, #tpu.memory_space<vmem>>, vector<1x128xf32>
    %128 = vector.shape_cast %127 : vector<1x128xf32> to vector<128xf32>
    %129 = vector.shape_cast %126 : vector<128xf32> to vector<1x128xf32>
    tpu.vector_store %arg7[%c23_79, %c0_80], %129 {strides = array<i32>} : memref<40x128xf32, #tpu.memory_space<vmem>>, vector<1x128xf32>,
    %c0_81 = arith.constant 0 : index
    %c24 = arith.constant 24 : index
    %130 = vector.load %arg6[%c0_81, %c24] : memref<1x256xf32, #tpu.memory_space<vmem>>, vector<1x128xf32>
    %131 = vector.shape_cast %130 : vector<1x128xf32> to vector<128xf32>
    %c24_82 = arith.constant 24 : index
    %c0_83 = arith.constant 0 : index
    %132 = vector.load %arg7[%c24_82, %c0_83] : memref<40x128xf32, #tpu.memory_space<vmem>>, vector<1x128xf32>
    %133 = vector.shape_cast %132 : vector<1x128xf32> to vector<128xf32>
    %134 = vector.shape_cast %131 : vector<128xf32> to vector<1x128xf32>
    tpu.vector_store %arg7[%c24_82, %c0_83], %134 {strides = array<i32>} : memref<40x128xf32, #tpu.memory_space<vmem>>, vector<1x128xf32>,
    %c0_84 = arith.constant 0 : index
    %c25 = arith.constant 25 : index
    %135 = vector.load %arg6[%c0_84, %c25] : memref<1x256xf32, #tpu.memory_space<vmem>>, vector<1x128xf32>
    %136 = vector.shape_cast %135 : vector<1x128xf32> to vector<128xf32>
    %c25_85 = arith.constant 25 : index
    %c0_86 = arith.constant 0 : index
    %137 = vector.load %arg7[%c25_85, %c0_86] : memref<40x128xf32, #tpu.memory_space<vmem>>, vector<1x128xf32>
    %138 = vector.shape_cast %137 : vector<1x128xf32> to vector<128xf32>
    %139 = vector.shape_cast %136 : vector<128xf32> to vector<1x128xf32>
    tpu.vector_store %arg7[%c25_85, %c0_86], %139 {strides = array<i32>} : memref<40x128xf32, #tpu.memory_space<vmem>>, vector<1x128xf32>,
    %c0_87 = arith.constant 0 : index
    %c26 = arith.constant 26 : index
    %140 = vector.load %arg6[%c0_87, %c26] : memref<1x256xf32, #tpu.memory_space<vmem>>, vector<1x128xf32>
    %141 = vector.shape_cast %140 : vector<1x128xf32> to vector<128xf32>
    %c26_88 = arith.constant 26 : index
    %c0_89 = arith.constant 0 : index
    %142 = vector.load %arg7[%c26_88, %c0_89] : memref<40x128xf32, #tpu.memory_space<vmem>>, vector<1x128xf32>
    %143 = vector.shape_cast %142 : vector<1x128xf32> to vector<128xf32>
    %144 = vector.shape_cast %141 : vector<128xf32> to vector<1x128xf32>
    tpu.vector_store %arg7[%c26_88, %c0_89], %144 {strides = array<i32>} : memref<40x128xf32, #tpu.memory_space<vmem>>, vector<1x128xf32>,
    %c0_90 = arith.constant 0 : index
    %c27 = arith.constant 27 : index
    %145 = vector.load %arg6[%c0_90, %c27] : memref<1x256xf32, #tpu.memory_space<vmem>>, vector<1x128xf32>
    %146 = vector.shape_cast %145 : vector<1x128xf32> to vector<128xf32>
    %c27_91 = arith.constant 27 : index
    %c0_92 = arith.constant 0 : index
    %147 = vector.load %arg7[%c27_91, %c0_92] : memref<40x128xf32, #tpu.memory_space<vmem>>, vector<1x128xf32>
    %148 = vector.shape_cast %147 : vector<1x128xf32> to vector<128xf32>
    %149 = vector.shape_cast %146 : vector<128xf32> to vector<1x128xf32>
    tpu.vector_store %arg7[%c27_91, %c0_92], %149 {strides = array<i32>} : memref<40x128xf32, #tpu.memory_space<vmem>>, vector<1x128xf32>,
    %c0_93 = arith.constant 0 : index
    %c28 = arith.constant 28 : index
    %150 = vector.load %arg6[%c0_93, %c28] : memref<1x256xf32, #tpu.memory_space<vmem>>, vector<1x128xf32>
    %151 = vector.shape_cast %150 : vector<1x128xf32> to vector<128xf32>
    %c28_94 = arith.constant 28 : index
    %c0_95 = arith.constant 0 : index
    %152 = vector.load %arg7[%c28_94, %c0_95] : memref<40x128xf32, #tpu.memory_space<vmem>>, vector<1x128xf32>
    %153 = vector.shape_cast %152 : vector<1x128xf32> to vector<128xf32>
    %154 = vector.shape_cast %151 : vector<128xf32> to vector<1x128xf32>
    tpu.vector_store %arg7[%c28_94, %c0_95], %154 {strides = array<i32>} : memref<40x128xf32, #tpu.memory_space<vmem>>, vector<1x128xf32>,
    %c0_96 = arith.constant 0 : index
    %c29 = arith.constant 29 : index
    %155 = vector.load %arg6[%c0_96, %c29] : memref<1x256xf32, #tpu.memory_space<vmem>>, vector<1x128xf32>
    %156 = vector.shape_cast %155 : vector<1x128xf32> to vector<128xf32>
    %c29_97 = arith.constant 29 : index
    %c0_98 = arith.constant 0 : index
    %157 = vector.load %arg7[%c29_97, %c0_98] : memref<40x128xf32, #tpu.memory_space<vmem>>, vector<1x128xf32>
    %158 = vector.shape_cast %157 : vector<1x128xf32> to vector<128xf32>
    %159 = vector.shape_cast %156 : vector<128xf32> to vector<1x128xf32>
    tpu.vector_store %arg7[%c29_97, %c0_98], %159 {strides = array<i32>} : memref<40x128xf32, #tpu.memory_space<vmem>>, vector<1x128xf32>,
    %c0_99 = arith.constant 0 : index
    %c30 = arith.constant 30 : index
    %160 = vector.load %arg6[%c0_99, %c30] : memref<1x256xf32, #tpu.memory_space<vmem>>, vector<1x128xf32>
    %161 = vector.shape_cast %160 : vector<1x128xf32> to vector<128xf32>
    %c30_100 = arith.constant 30 : index
    %c0_101 = arith.constant 0 : index
    %162 = vector.load %arg7[%c30_100, %c0_101] : memref<40x128xf32, #tpu.memory_space<vmem>>, vector<1x128xf32>
    %163 = vector.shape_cast %162 : vector<1x128xf32> to vector<128xf32>
    %164 = vector.shape_cast %161 : vector<128xf32> to vector<1x128xf32>
    tpu.vector_store %arg7[%c30_100, %c0_101], %164 {strides = array<i32>} : memref<40x128xf32, #tpu.memory_space<vmem>>, vector<1x128xf32>,
    %c0_102 = arith.constant 0 : index
    %c31 = arith.constant 31 : index
    %165 = vector.load %arg6[%c0_102, %c31] : memref<1x256xf32, #tpu.memory_space<vmem>>, vector<1x128xf32>
    %166 = vector.shape_cast %165 : vector<1x128xf32> to vector<128xf32>
    %c31_103 = arith.constant 31 : index
    %c0_104 = arith.constant 0 : index
    %167 = vector.load %arg7[%c31_103, %c0_104] : memref<40x128xf32, #tpu.memory_space<vmem>>, vector<1x128xf32>
    %168 = vector.shape_cast %167 : vector<1x128xf32> to vector<128xf32>
    %169 = vector.shape_cast %166 : vector<128xf32> to vector<1x128xf32>
    tpu.vector_store %arg7[%c31_103, %c0_104], %169 {strides = array<i32>} : memref<40x128xf32, #tpu.memory_space<vmem>>, vector<1x128xf32>,
    %c0_105 = arith.constant 0 : index
    %c32 = arith.constant 32 : index
    %170 = vector.load %arg6[%c0_105, %c32] : memref<1x256xf32, #tpu.memory_space<vmem>>, vector<1x128xf32>
    %171 = vector.shape_cast %170 : vector<1x128xf32> to vector<128xf32>
    %c32_106 = arith.constant 32 : index
    %c0_107 = arith.constant 0 : index
    %172 = vector.load %arg7[%c32_106, %c0_107] : memref<40x128xf32, #tpu.memory_space<vmem>>, vector<1x128xf32>
    %173 = vector.shape_cast %172 : vector<1x128xf32> to vector<128xf32>
    %174 = vector.shape_cast %171 : vector<128xf32> to vector<1x128xf32>
    tpu.vector_store %arg7[%c32_106, %c0_107], %174 {strides = array<i32>} : memref<40x128xf32, #tpu.memory_space<vmem>>, vector<1x128xf32>,
    %cst = arith.constant 0.000000e+00 : f32
    %175 = vector.broadcast %cst : f32 to vector<7x128xf32>
    %c33 = arith.constant 33 : index
    %c0_108 = arith.constant 0 : index
    %176 = vector.load %arg7[%c33, %c0_108] : memref<40x128xf32, #tpu.memory_space<vmem>>, vector<7x128xf32>
    tpu.vector_store %arg7[%c33, %c0_108], %175 {strides = array<i32>} : memref<40x128xf32, #tpu.memory_space<vmem>>, vector<7x128xf32>,
    %c0_109 = arith.constant 0 : index
    %c0_110 = arith.constant 0 : index
    %177 = vector.load %arg4[%c0_109, %c0_110] : memref<16x40xf32, #tpu.memory_space<vmem>>, vector<16x40xf32>
    %c0_111 = arith.constant 0 : index
    %c0_112 = arith.constant 0 : index
    %178 = vector.load %arg7[%c0_111, %c0_112] : memref<40x128xf32, #tpu.memory_space<vmem>>, vector<40x128xf32>
    %cst_113 = arith.constant dense<0.000000e+00> : vector<16x128xf32>
    %179 = tpu.matmul %177, %178, %cst_113 {dimension_numbers = #tpu.dot_dimension_numbers<[1], [0], [0], [1], [0, 0, 1, 1], [], []>} : vector<16x40xf32>, vector<40x128xf32>, vector<16x128xf32> -> vector<16x128xf32>
    %c0_114 = arith.constant 0 : index
    %c0_115 = arith.constant 0 : index
    %c0_116 = arith.constant 0 : index
    %180 = vector.load %arg5[%c0_114, %c0_115, %c0_116] : memref<1x16x128xf32, #tpu.memory_space<vmem>>, vector<1x16x128xf32>
    %181 = vector.shape_cast %180 : vector<1x16x128xf32> to vector<16x128xf32>
    %182 = vector.shape_cast %179 : vector<16x128xf32> to vector<1x16x128xf32>
    tpu.vector_store %arg5[%c0_114, %c0_115, %c0_116], %182 {strides = array<i32>} : memref<1x16x128xf32, #tpu.memory_space<vmem>>, vector<1x16x128xf32>,
    return
  }
  func.func @transform_0(%arg0: i32, %arg1: i32) -> (i32, i32, i32) {
    %c0_i32 = arith.constant 0 : i32
    %c0_i32_0 = arith.constant 0 : i32
    return %arg0, %c0_i32, %arg1 : i32, i32, i32
  }
  func.func @transform_1(%arg0: i32, %arg1: i32) -> (i32, i32, i32) {
    %c1_i32 = arith.constant 1 : i32
    %0 = arith.addi %arg1, %c1_i32 : i32
    %c1_i32_0 = arith.constant 1 : i32
    %1 = arith.muli %0, %c1_i32_0 : i32
    %c0_i32 = arith.constant 0 : i32
    %c0_i32_1 = arith.constant 0 : i32
    return %arg0, %c0_i32, %1 : i32, i32, i32
  }
  func.func @transform_2(%arg0: i32, %arg1: i32) -> (i32, i32) {
    %c0_i32 = arith.constant 0 : i32
    %c0_i32_0 = arith.constant 0 : i32
    %c0_i32_1 = arith.constant 0 : i32
    return %c0_i32, %c0_i32_0 : i32, i32
  }
  func.func @transform_3(%arg0: i32, %arg1: i32) -> (i32, i32, i32) {
    %c0_i32 = arith.constant 0 : i32
    %c0_i32_0 = arith.constant 0 : i32
    return %arg0, %c0_i32, %arg1 : i32, i32, i32
  }
}

</mosaic_0001>

<llo_original>
// kernel: tpu_custom_call.1
$region0: #{tpu_custom_call.1}
  #allocation0 [shape = 'u32[]', space=smem, size = 0x4, offset = 0x4, fixed_abs, tag = 'smem constant byte address 0x4 - core index']
  #allocation1 [shape = 'u32[144,128]{1,0:T(1,128)}', space=vmem, size = 0x12000, scoped, tag = 'internal scratch']
  #allocation2 [shape = 'f32[1,256]{1,0:T(1,128)}', space=vmem, size = 0x400, scoped, tag = 'scratch operand']
  #allocation3 [shape = 'f32[40,128]{1,0:T(8,128)}', space=vmem, size = 0x5000, scoped, tag = 'scratch operand']
  %s0 = inlined_call_operand.hbm [shape: f32[2,1,384], index: 0, kind: input, shape index: {}]
  %s1 = inlined_call_operand.hbm [shape: f32[2,1,384], index: 1, kind: input, shape index: {}]
  %s2 = inlined_call_operand.hbm [shape: f32[16,40], index: 2, kind: input, shape index: {}]
  %s3 = inlined_call_operand.hbm [shape: f32[2,16,256], index: 3, kind: output, shape index: {}]
  %s4 = sld [smem:[#allocation0]]
  $region57: #{tpu_custom_call.1} parent=0
    _
  %s6 = ssub.s32 1, %s4
  %s7 = scalar_select 0, %s6, %s4
  $region1: #{tpu_custom_call.1} parent=0
    #allocation4 [shape = 'u8[1024]{0}', space=vmem, size = 0x400, scoped, tag = 'input window, operand 0']
    #allocation5 [shape = 's32[2]{0}', space=sflag, size = 0x8, scoped, tag = 'scoped memory for tpu_custom_call.1']
    #allocation6 [shape = 's32[2]{0}', space=sflag, size = 0x8, scoped, tag = 'scoped memory for tpu_custom_call.1']
    #allocation7 [shape = 'u8[1024]{0}', space=vmem, size = 0x400, scoped, tag = 'input window, operand 1']
    #allocation8 [shape = 's32[2]{0}', space=sflag, size = 0x8, scoped, tag = 'scoped memory for tpu_custom_call.1']
    #allocation9 [shape = 'u8[8192]{0}', space=vmem, size = 0x2000, scoped, tag = 'input window, operand 2, single buffered']
    #allocation10 [shape = 'u8[16384]{0}', space=vmem, size = 0x4000, scoped, tag = 'output window, operand 0']
    %8 = vsyncpa [#allocation5], 0
    %s9 = scalar_lea.sflag [#allocation5], 1
    %10 = vsyncpa %s9, 0
    %11 = vsyncpa [#allocation8], 0
    %s12 = scalar_lea.sflag [#allocation8], 1
    %13 = vsyncpa %s12, 0
    %14 = vsyncpa [#allocation6], 0
    %s15 = scalar_lea.sflag [#allocation6], 1
    %16 = vsyncpa %s15, 0
    loop: start=0, step=1, limit=6
    $region2: #{tpu_custom_call.1} parent=1 // loop_pre_header
      _
    $region3: #{tpu_custom_call.1} parent=1 // loop_header
      %s18 = sphi 0, %s22
      %p19 = scmp.ge.s32.totalorder %s18, 6
      %s25 = sphi 0, %s37
      %s26 = sphi 0, %s33
      %s27 = sphi 0, %s25
      %s28 = sphi 0, %s26
      %s29 = sphi 0, %s27
      %s30 = sphi 0, %s28
      %s42 = sphi 0, %s44
      %s45 = sphi 0, %s42
      %s46 = sphi 0, %s45
      %s62 = sphi 0, %s46
      %s72 = sphi 0, %s74
      %s75 = sphi 0, %s72
      %s76 = sphi 0, %s75
      %s92 = sphi 0, %s76
      %s96 = sphi 0, %s96
      %s98 = sphi 0, %s96
      %s99 = sphi 0, %s98
      %s113 = sphi 0, %s99
      %s121 = sphi 0, %s123
      %s124 = sphi 0, %s121
      %s125 = sphi 0, %s124
      %s141 = sphi 0, %s125
    $region4: #{tpu_custom_call.1} parent=1 // loop_header_branch
      %21 = sbr.rel (%p19) target = $region8
    $region5: #{tpu_custom_call.1} parent=1 // loop_body
      %s23 = ssub.s32 %s18, 1
      %s24 = ssub.s32 %s18, 2
      %s31 = sadd.s32 1, %s26
      %p32 = scmp.ge.s32.totalorder %s31, 2
      %s33 = scalar_select %p32, 0, %s31
      %s34 = sadd.s32 1, %s25
      %s35 = scalar_select %p32, %s34, %s25
      %p36 = scmp.ge.s32.totalorder %s35, 2
      %s37 = scalar_select %p36, 0, %s35
      %s38 = ssub.s32 %s25, %s37
      %s39 = ssub.s32 %s26, %s33
      %s40 = sor.u32 %s38, %s39
      %p41 = scmp.eq.s32.totalorder %s40, 0
      %s43 = sadd.s32 %s42, 1
      %s44 = scalar_select %p41, %s42, %s43
      %p47 = pneg %p41
      %p48 = scmp.eq.s32.totalorder %s18, 3
      %p49 = por %p47, %p48
      %p50 = scmp.ne.s32.totalorder %s42, %s45
      %p51 = scmp.eq.s32.totalorder %s18, 0
      %p52 = por %p50, %p51
      %p53 = scmp.ne.s32.totalorder %s42, %s45
      %p54 = scmp.eq.s32.totalorder %s23, 3
      %p55 = por %p53, %p54
      %p56 = scmp.ne.s32.totalorder %s45, %s46
      %p57 = scmp.eq.s32.totalorder %s23, 0
      %p58 = por %p56, %p57
      %p59 = scmp.ne.s32.totalorder %s45, %s46
      %p60 = scmp.eq.s32.totalorder %s24, 3
      %p61 = por %p59, %p60
      %p63 = scmp.ne.s32.totalorder %s46, %s62
      %p64 = scmp.eq.s32.totalorder %s24, 0
      %p65 = por %p63, %p64
      %s66 = sadd.s32 %s26, 1
      %s67 = sadd.s32 %s33, 1
      %s68 = ssub.s32 %s25, %s37
      %s69 = ssub.s32 %s66, %s67
      %s70 = sor.u32 %s68, %s69
      %p71 = scmp.eq.s32.totalorder %s70, 0
      %s73 = sadd.s32 %s72, 1
      %s74 = scalar_select %p71, %s72, %s73
      %p77 = pneg %p71
      %p78 = scmp.eq.s32.totalorder %s18, 3
      %p79 = por %p77, %p78
      %p80 = scmp.ne.s32.totalorder %s72, %s75
      %p81 = scmp.eq.s32.totalorder %s18, 0
      %p82 = por %p80, %p81
      %p83 = scmp.ne.s32.totalorder %s72, %s75
      %p84 = scmp.eq.s32.totalorder %s23, 3
      %p85 = por %p83, %p84
      %p86 = scmp.ne.s32.totalorder %s75, %s76
      %p87 = scmp.eq.s32.totalorder %s23, 0
      %p88 = por %p86, %p87
      %p89 = scmp.ne.s32.totalorder %s75, %s76
      %p90 = scmp.eq.s32.totalorder %s24, 3
      %p91 = por %p89, %p90
      %p93 = scmp.ne.s32.totalorder %s76, %s92
      %p94 = scmp.eq.s32.totalorder %s24, 0
      %p95 = por %p93, %p94
      %s97 = sadd.s32 %s96, 1
      %p100 = scmp.eq.s32.totalorder %s18, 3
      %p101 = scmp.ne.s32.totalorder %s96, %s98
      %p102 = scmp.eq.s32.totalorder %s18, 0
      %p103 = por %p101, %p102
      %p104 = scmp.ne.s32.totalorder %s96, %s98
      %p105 = scmp.eq.s32.totalorder %s23, 3
      %p106 = por %p104, %p105
      %p107 = scmp.ne.s32.totalorder %s98, %s99
      %p108 = scmp.eq.s32.totalorder %s23, 0
      %p109 = por %p107, %p108
      %p110 = scmp.ne.s32.totalorder %s98, %s99
      %p111 = scmp.eq.s32.totalorder %s24, 3
      %p112 = por %p110, %p111
      %p114 = scmp.ne.s32.totalorder %s99, %s113
      %p115 = scmp.eq.s32.totalorder %s24, 0
      %p116 = por %p114, %p115
      %s117 = ssub.s32 %s25, %s37
      %s118 = ssub.s32 %s26, %s33
      %s119 = sor.u32 %s117, %s118
      %p120 = scmp.eq.s32.totalorder %s119, 0
      %s122 = sadd.s32 %s121, 1
      %s123 = scalar_select %p120, %s121, %s122
      %p126 = pneg %p120
      %p127 = scmp.eq.s32.totalorder %s18, 3
      %p128 = por %p126, %p127
      %p129 = scmp.ne.s32.totalorder %s121, %s124
      %p130 = scmp.eq.s32.totalorder %s18, 0
      %p131 = por %p129, %p130
      %p132 = scmp.ne.s32.totalorder %s121, %s124
      %p133 = scmp.eq.s32.totalorder %s23, 3
      %p134 = por %p132, %p133
      %p135 = scmp.ne.s32.totalorder %s124, %s125
      %p136 = scmp.eq.s32.totalorder %s23, 0
      %p137 = por %p135, %p136
      %p138 = scmp.ne.s32.totalorder %s124, %s125
      %p139 = scmp.eq.s32.totalorder %s24, 3
      %p140 = por %p138, %p139
      %p142 = scmp.ne.s32.totalorder %s125, %s141
      %p143 = scmp.eq.s32.totalorder %s24, 0
      %p144 = por %p142, %p143
      %p145 = scmp.le.s32.totalorder 1, %s18
      %p146 = scmp.lt.s32.totalorder %s18, 5
      %p147 = pnand %p145, %p146
      %p148 = pneg %p147
      // Predicated region
      $region9: #{tpu_custom_call.1} parent=5 // pred_check
        _
      $region10: #{tpu_custom_call.1} parent=5 // pred_check_branch
        %150 = sbr.rel (%p147) target = $region12
      $region11: #{tpu_custom_call.1} parent=5 // pred_region
        %s151 = ssub.s32 %s18, 1
        // Predicated region
        $region13: #{tpu_custom_call.1} parent=11 // pred_check
          %p152 = pneg %p109
        $region14: #{tpu_custom_call.1} parent=11 // pred_check_branch
          %154 = sbr.rel (%p152) target = $region16
        $region15: #{tpu_custom_call.1} parent=11 // pred_region
          %s156 = ssub.s32 256, 256
          %157 = vsyncadd [#allocation8], %s156
          %s158 = sshll.u32 [#allocation9], 4
          %s159 = int_to_ptr.vmem [resolvable:$true] %s158
          %164 = dma.hbm_to_vmem [thread:$0]  %s2, 256, %s159, [#allocation8], 128, 128, 8
        $region16: #{tpu_custom_call.1} parent=11 // pred_fallthru
          _
      $region12: #{tpu_custom_call.1} parent=5 // pred_fallthru
        _
      %p165 = scmp.lt.s32.totalorder %s18, 4
      // Predicated region
      $region17: #{tpu_custom_call.1} parent=5 // pred_check
        %p166 = pneg %p165
      $region18: #{tpu_custom_call.1} parent=5 // pred_check_branch
        %168 = sbr.rel (%p166) target = $region20
      $region19: #{tpu_custom_call.1} parent=5 // pred_region
        // Predicated region
        $region21: #{tpu_custom_call.1} parent=19 // pred_check
          %p169 = pneg %p52
        $region22: #{tpu_custom_call.1} parent=19 // pred_check_branch
          %171 = sbr.rel (%p169) target = $region24
        $region23: #{tpu_custom_call.1} parent=19 // pred_region
          %s172 = sand.u32 %s42, 1
          %s173 = scalar_lea.sflag [#allocation5], %s172
          %s174 = sand.u32 %s42, 1
          %s175 = scalar_lea.vmem [#allocation4], %s174
          %s177 = ssub.s32 16, 16
          %178 = vsyncadd %s173, %s177
          %s179 = smul.addr %s25, 3
          %s180 = sadd.s32 %s26, %s179
          %s181 = smul.addr %s180, 16
          %s182 = scalar_lea.hbm %s0, %s181
          %s184 = sshll.u32 %s175, 4
          %s185 = int_to_ptr.vmem [resolvable:$true] %s184
          %187 = dma.hbm_to_vmem [thread:$0]  %s182, 16, %s185, %s173
        $region24: #{tpu_custom_call.1} parent=19 // pred_fallthru
          _
        // Predicated region
        $region25: #{tpu_custom_call.1} parent=19 // pred_check
          %p188 = pneg %p82
        $region26: #{tpu_custom_call.1} parent=19 // pred_check_branch
          %190 = sbr.rel (%p188) target = $region28
        $region27: #{tpu_custom_call.1} parent=19 // pred_region
          %s191 = sand.u32 %s18, 1
          %s192 = scalar_lea.sflag [#allocation8], %s191
          %s193 = sand.u32 %s72, 1
          %s194 = scalar_lea.vmem [#allocation7], %s193
          %s195 = sadd.s32 %s26, 1
          %s197 = ssub.s32 16, 16
          %198 = vsyncadd %s192, %s197
          %s199 = smul.addr %s25, 3
          %s200 = sadd.s32 %s195, %s199
          %s201 = smul.addr %s200, 16
          %s202 = scalar_lea.hbm %s1, %s201
          %s204 = sshll.u32 %s194, 4
          %s205 = int_to_ptr.vmem [resolvable:$true] %s204
          %207 = dma.hbm_to_vmem [thread:$0]  %s202, 16, %s205, %s192
        $region28: #{tpu_custom_call.1} parent=19 // pred_fallthru
          _
      $region20: #{tpu_custom_call.1} parent=5 // pred_fallthru
        _
      %p208 = scmp.le.s32.totalorder 1, %s18
      %p209 = scmp.lt.s32.totalorder %s18, 5
      %p210 = pnand %p208, %p209
      %p211 = pneg %p210
      // Predicated region
      $region29: #{tpu_custom_call.1} parent=5 // pred_check
        _
      $region30: #{tpu_custom_call.1} parent=5 // pred_check_branch
        %213 = sbr.rel (%p210) target = $region32
      $region31: #{tpu_custom_call.1} parent=5 // pred_region
        %s214 = ssub.s32 %s18, 1
        %s215 = sand.u32 %s45, 1
        %s216 = scalar_lea.sflag [#allocation5], %s215
        %s217 = sand.u32 %s45, 1
        %s218 = scalar_lea.vmem [#allocation4], %s217
        // Predicated region
        $region33: #{tpu_custom_call.1} parent=31 // pred_check
          %p219 = pneg %p58
        $region34: #{tpu_custom_call.1} parent=31 // pred_check_branch
          %221 = sbr.rel (%p219) target = $region36
        $region35: #{tpu_custom_call.1} parent=31 // pred_region
          %222 = dma.done %s216, 16
        $region36: #{tpu_custom_call.1} parent=31 // pred_fallthru
          _
        %s223 = sand.u32 %s23, 1
        %s224 = scalar_lea.sflag [#allocation8], %s223
        %s225 = sand.u32 %s75, 1
        %s226 = scalar_lea.vmem [#allocation7], %s225
        // Predicated region
        $region37: #{tpu_custom_call.1} parent=31 // pred_check
          %p227 = pneg %p88
        $region38: #{tpu_custom_call.1} parent=31 // pred_check_branch
          %229 = sbr.rel (%p227) target = $region40
        $region39: #{tpu_custom_call.1} parent=31 // pred_region
          %230 = dma.done %s224, 16
        $region40: #{tpu_custom_call.1} parent=31 // pred_fallthru
          _
        // Predicated region
        $region41: #{tpu_custom_call.1} parent=31 // pred_check
          %p231 = pneg %p109
        $region42: #{tpu_custom_call.1} parent=31 // pred_check_branch
          %233 = sbr.rel (%p231) target = $region44
        $region43: #{tpu_custom_call.1} parent=31 // pred_region
          %234 = dma.done [#allocation8], 256
        $region44: #{tpu_custom_call.1} parent=31 // pred_fallthru
          _
        %s235 = sand.u32 %s45, 1
        %s236 = scalar_lea.sflag [#allocation5], %s235
        %s237 = sand.u32 %s45, 1
        %s238 = scalar_lea.vmem [#allocation4], %s237
        %p239 = pneg %p58
        %p240 = pneg %p55
        %s241 = sand.u32 %s23, 1
        %s242 = scalar_lea.sflag [#allocation8], %s241
        %s243 = sand.u32 %s75, 1
        %s244 = scalar_lea.vmem [#allocation7], %s243
        %p245 = pneg %p88
        %p246 = pneg %p85
        %p247 = pneg %p109
        %p248 = pneg %p106
        %p249 = pneg %p137
        %p250 = pneg %p134
        %s251 = sand.u32 %s124, 1
        %s252 = scalar_lea.sflag [#allocation6], %s251
        %s253 = sand.u32 %s124, 1
        %s254 = smul.addr %s253, 16
        %s255 = scalar_lea.vmem [#allocation10], %s254
        %s256 = sadd.s32 %s28, 1
        %v257 = vld [vmem:[%s218] sm:$0x1]
        %v258 = vlaneseq
        %vm259 = vcmp.ge.s32.totalorder %v258, 0
        %vm260 = vcmp.lt.s32.totalorder %v258, 128
        %vm261 = vmand %vm259, %vm260
        %262 = vst.msk [vmem:[#allocation2] sm:$0x1] %vm261, %v257
        %v263 = vld [vmem:[%s226] sm:$0x1]
        %264 = vst.msk [vmem:[#allocation2 + $0x1] sm:$0x1] %vm261, %v263
        %v265 = vld [vmem:[#allocation2] sm:$0x1]
        %266 = vst [vmem:[#allocation3] sm:$0x1] %v265
        %v267 = vld [vmem:[#allocation2] sm:$0x3]
        %v269 = vlaneseq
        %v270 = vshrl.u32 %v269, 7
        %v271 = vsub.s32 0, %v270
        %v272 = vrot.slane %v267, %v271
        %v273 = vlaneseq
        %v274 = vshrl.u32 %v273, 7
        %v275 = vsub.s32 1, %v274
        %v276 = vrot.slane %v267, %v275
        %277 = vrot.lane.b32.xlu0 %v272, 127
        %v278 = vpop.permute.xlu0 %277
        %279 = vrot.lane.b32.xlu0 %v276, 127
        %v280 = vpop.permute.xlu0 %279
        %vm281 = vcmask 1039360
        %v282 = vsel %vm281, %v278, %v280
        %284 = vst [vmem:[#allocation3 + $0x1] sm:$0x1] %v282
        %v285 = vld [vmem:[#allocation2] sm:$0x3]
        %v287 = vlaneseq
        %v288 = vshrl.u32 %v287, 7
        %v289 = vsub.s32 0, %v288
        %v290 = vrot.slane %v285, %v289
        %v291 = vlaneseq
        %v292 = vshrl.u32 %v291, 7
        %v293 = vsub.s32 1, %v292
        %v294 = vrot.slane %v285, %v293
        %295 = vrot.lane.b32.xlu0 %v290, 126
        %v296 = vpop.permute.xlu0 %295
        %297 = vrot.lane.b32.xlu0 %v294, 126
        %v298 = vpop.permute.xlu0 %297
        %vm299 = vcmask 1031168
        %v300 = vsel %vm299, %v296, %v298
        %302 = vst [vmem:[#allocation3 + $0x2] sm:$0x1] %v300
        %v303 = vld [vmem:[#allocation2] sm:$0x3]
        %v305 = vlaneseq
        %v306 = vshrl.u32 %v305, 7
        %v307 = vsub.s32 0, %v306
        %v308 = vrot.slane %v303, %v307
        %v309 = vlaneseq
        %v310 = vshrl.u32 %v309, 7
        %v311 = vsub.s32 1, %v310
        %v312 = vrot.slane %v303, %v311
        %313 = vrot.lane.b32.xlu0 %v308, 125
        %v314 = vpop.permute.xlu0 %313
        %315 = vrot.lane.b32.xlu0 %v312, 125
        %v316 = vpop.permute.xlu0 %315
        %vm317 = vcmask 1022976
        %v318 = vsel %vm317, %v314, %v316
        %320 = vst [vmem:[#allocation3 + $0x3] sm:$0x1] %v318
        %v321 = vld [vmem:[#allocation2] sm:$0x3]
        %v323 = vlaneseq
        %v324 = vshrl.u32 %v323, 7
        %v325 = vsub.s32 0, %v324
        %v326 = vrot.slane %v321, %v325
        %v327 = vlaneseq
        %v328 = vshrl.u32 %v327, 7
        %v329 = vsub.s32 1, %v328
        %v330 = vrot.slane %v321, %v329
        %331 = vrot.lane.b32.xlu0 %v326, 124
        %v332 = vpop.permute.xlu0 %331
        %333 = vrot.lane.b32.xlu0 %v330, 124
        %v334 = vpop.permute.xlu0 %333
        %vm335 = vcmask 1014784
        %v336 = vsel %vm335, %v332, %v334
        %338 = vst [vmem:[#allocation3 + $0x4] sm:$0x1] %v336
        %v339 = vld [vmem:[#allocation2] sm:$0x3]
        %v341 = vlaneseq
        %v342 = vshrl.u32 %v341, 7
        %v343 = vsub.s32 0, %v342
        %v344 = vrot.slane %v339, %v343
        %v345 = vlaneseq
        %v346 = vshrl.u32 %v345, 7
        %v347 = vsub.s32 1, %v346
        %v348 = vrot.slane %v339, %v347
        %349 = vrot.lane.b32.xlu0 %v344, 123
        %v350 = vpop.permute.xlu0 %349
        %351 = vrot.lane.b32.xlu0 %v348, 123
        %v352 = vpop.permute.xlu0 %351
        %vm353 = vcmask 1006592
        %v354 = vsel %vm353, %v350, %v352
        %356 = vst [vmem:[#allocation3 + $0x5] sm:$0x1] %v354
        %v357 = vld [vmem:[#allocation2] sm:$0x3]
        %v359 = vlaneseq
        %v360 = vshrl.u32 %v359, 7
        %v361 = vsub.s32 0, %v360
        %v362 = vrot.slane %v357, %v361
        %v363 = vlaneseq
        %v364 = vshrl.u32 %v363, 7
        %v365 = vsub.s32 1, %v364
        %v366 = vrot.slane %v357, %v365
        %367 = vrot.lane.b32.xlu0 %v362, 122
        %v368 = vpop.permute.xlu0 %367
        %369 = vrot.lane.b32.xlu0 %v366, 122
        %v370 = vpop.permute.xlu0 %369
        %vm371 = vcmask 998400
        %v372 = vsel %vm371, %v368, %v370
        %374 = vst [vmem:[#allocation3 + $0x6] sm:$0x1] %v372
        %v375 = vld [vmem:[#allocation2] sm:$0x3]
        %v377 = vlaneseq
        %v378 = vshrl.u32 %v377, 7
        %v379 = vsub.s32 0, %v378
        %v380 = vrot.slane %v375, %v379
        %v381 = vlaneseq
        %v382 = vshrl.u32 %v381, 7
        %v383 = vsub.s32 1, %v382
        %v384 = vrot.slane %v375, %v383
        %385 = vrot.lane.b32.xlu0 %v380, 121
        %v386 = vpop.permute.xlu0 %385
        %387 = vrot.lane.b32.xlu0 %v384, 121
        %v388 = vpop.permute.xlu0 %387
        %vm389 = vcmask 990208
        %v390 = vsel %vm389, %v386, %v388
        %392 = vst [vmem:[#allocation3 + $0x7] sm:$0x1] %v390
        %v393 = vld [vmem:[#allocation2] sm:$0x3]
        %v395 = vlaneseq
        %v396 = vshrl.u32 %v395, 7
        %v397 = vsub.s32 0, %v396
        %v398 = vrot.slane %v393, %v397
        %v399 = vlaneseq
        %v400 = vshrl.u32 %v399, 7
        %v401 = vsub.s32 1, %v400
        %v402 = vrot.slane %v393, %v401
        %403 = vrot.lane.b32.xlu0 %v398, 120
        %v404 = vpop.permute.xlu0 %403
        %405 = vrot.lane.b32.xlu0 %v402, 120
        %v406 = vpop.permute.xlu0 %405
        %vm407 = vcmask 982016
        %v408 = vsel %vm407, %v404, %v406
        %410 = vst [vmem:[#allocation3 + $0x8] sm:$0x1] %v408
        %v411 = vld [vmem:[#allocation2] sm:$0x3]
        %v413 = vlaneseq
        %v414 = vshrl.u32 %v413, 7
        %v415 = vsub.s32 0, %v414
        %v416 = vrot.slane %v411, %v415
        %v417 = vlaneseq
        %v418 = vshrl.u32 %v417, 7
        %v419 = vsub.s32 1, %v418
        %v420 = vrot.slane %v411, %v419
        %421 = vrot.lane.b32.xlu0 %v416, 119
        %v422 = vpop.permute.xlu0 %421
        %423 = vrot.lane.b32.xlu0 %v420, 119
        %v424 = vpop.permute.xlu0 %423
        %vm425 = vcmask 973824
        %v426 = vsel %vm425, %v422, %v424
        %428 = vst [vmem:[#allocation3 + $0x9] sm:$0x1] %v426
        %v429 = vld [vmem:[#allocation2] sm:$0x3]
        %v431 = vlaneseq
        %v432 = vshrl.u32 %v431, 7
        %v433 = vsub.s32 0, %v432
        %v434 = vrot.slane %v429, %v433
        %v435 = vlaneseq
        %v436 = vshrl.u32 %v435, 7
        %v437 = vsub.s32 1, %v436
        %v438 = vrot.slane %v429, %v437
        %439 = vrot.lane.b32.xlu0 %v434, 118
        %v440 = vpop.permute.xlu0 %439
        %441 = vrot.lane.b32.xlu0 %v438, 118
        %v442 = vpop.permute.xlu0 %441
        %vm443 = vcmask 965632
        %v444 = vsel %vm443, %v440, %v442
        %446 = vst [vmem:[#allocation3 + $0xa] sm:$0x1] %v444
        %v447 = vld [vmem:[#allocation2] sm:$0x3]
        %v449 = vlaneseq
        %v450 = vshrl.u32 %v449, 7
        %v451 = vsub.s32 0, %v450
        %v452 = vrot.slane %v447, %v451
        %v453 = vlaneseq
        %v454 = vshrl.u32 %v453, 7
        %v455 = vsub.s32 1, %v454
        %v456 = vrot.slane %v447, %v455
        %457 = vrot.lane.b32.xlu0 %v452, 117
        %v458 = vpop.permute.xlu0 %457
        %459 = vrot.lane.b32.xlu0 %v456, 117
        %v460 = vpop.permute.xlu0 %459
        %vm461 = vcmask 957440
        %v462 = vsel %vm461, %v458, %v460
        %464 = vst [vmem:[#allocation3 + $0xb] sm:$0x1] %v462
        %v465 = vld [vmem:[#allocation2] sm:$0x3]
        %v467 = vlaneseq
        %v468 = vshrl.u32 %v467, 7
        %v469 = vsub.s32 0, %v468
        %v470 = vrot.slane %v465, %v469
        %v471 = vlaneseq
        %v472 = vshrl.u32 %v471, 7
        %v473 = vsub.s32 1, %v472
        %v474 = vrot.slane %v465, %v473
        %475 = vrot.lane.b32.xlu0 %v470, 116
        %v476 = vpop.permute.xlu0 %475
        %477 = vrot.lane.b32.xlu0 %v474, 116
        %v478 = vpop.permute.xlu0 %477
        %vm479 = vcmask 949248
        %v480 = vsel %vm479, %v476, %v478
        %482 = vst [vmem:[#allocation3 + $0xc] sm:$0x1] %v480
        %v483 = vld [vmem:[#allocation2] sm:$0x3]
        %v485 = vlaneseq
        %v486 = vshrl.u32 %v485, 7
        %v487 = vsub.s32 0, %v486
        %v488 = vrot.slane %v483, %v487
        %v489 = vlaneseq
        %v490 = vshrl.u32 %v489, 7
        %v491 = vsub.s32 1, %v490
        %v492 = vrot.slane %v483, %v491
        %493 = vrot.lane.b32.xlu0 %v488, 115
        %v494 = vpop.permute.xlu0 %493
        %495 = vrot.lane.b32.xlu0 %v492, 115
        %v496 = vpop.permute.xlu0 %495
        %vm497 = vcmask 941056
        %v498 = vsel %vm497, %v494, %v496
        %500 = vst [vmem:[#allocation3 + $0xd] sm:$0x1] %v498
        %v501 = vld [vmem:[#allocation2] sm:$0x3]
        %v503 = vlaneseq
        %v504 = vshrl.u32 %v503, 7
        %v505 = vsub.s32 0, %v504
        %v506 = vrot.slane %v501, %v505
        %v507 = vlaneseq
        %v508 = vshrl.u32 %v507, 7
        %v509 = vsub.s32 1, %v508
        %v510 = vrot.slane %v501, %v509
        %511 = vrot.lane.b32.xlu0 %v506, 114
        %v512 = vpop.permute.xlu0 %511
        %513 = vrot.lane.b32.xlu0 %v510, 114
        %v514 = vpop.permute.xlu0 %513
        %vm515 = vcmask 932864
        %v516 = vsel %vm515, %v512, %v514
        %518 = vst [vmem:[#allocation3 + $0xe] sm:$0x1] %v516
        %v519 = vld [vmem:[#allocation2] sm:$0x3]
        %v521 = vlaneseq
        %v522 = vshrl.u32 %v521, 7
        %v523 = vsub.s32 0, %v522
        %v524 = vrot.slane %v519, %v523
        %v525 = vlaneseq
        %v526 = vshrl.u32 %v525, 7
        %v527 = vsub.s32 1, %v526
        %v528 = vrot.slane %v519, %v527
        %529 = vrot.lane.b32.xlu0 %v524, 113
        %v530 = vpop.permute.xlu0 %529
        %531 = vrot.lane.b32.xlu0 %v528, 113
        %v532 = vpop.permute.xlu0 %531
        %vm533 = vcmask 924672
        %v534 = vsel %vm533, %v530, %v532
        %536 = vst [vmem:[#allocation3 + $0xf] sm:$0x1] %v534
        %v537 = vld [vmem:[#allocation2] sm:$0x3]
        %v539 = vlaneseq
        %v540 = vshrl.u32 %v539, 7
        %v541 = vsub.s32 0, %v540
        %v542 = vrot.slane %v537, %v541
        %v543 = vlaneseq
        %v544 = vshrl.u32 %v543, 7
        %v545 = vsub.s32 1, %v544
        %v546 = vrot.slane %v537, %v545
        %547 = vrot.lane.b32.xlu0 %v542, 112
        %v548 = vpop.permute.xlu0 %547
        %549 = vrot.lane.b32.xlu0 %v546, 112
        %v550 = vpop.permute.xlu0 %549
        %vm551 = vcmask 916480
        %v552 = vsel %vm551, %v548, %v550
        %554 = vst [vmem:[#allocation3 + $0x10] sm:$0x1] %v552
        %v555 = vld [vmem:[#allocation2] sm:$0x3]
        %v557 = vlaneseq
        %v558 = vshrl.u32 %v557, 7
        %v559 = vsub.s32 0, %v558
        %v560 = vrot.slane %v555, %v559
        %v561 = vlaneseq
        %v562 = vshrl.u32 %v561, 7
        %v563 = vsub.s32 1, %v562
        %v564 = vrot.slane %v555, %v563
        %565 = vrot.lane.b32.xlu0 %v560, 111
        %v566 = vpop.permute.xlu0 %565
        %567 = vrot.lane.b32.xlu0 %v564, 111
        %v568 = vpop.permute.xlu0 %567
        %vm569 = vcmask 908288
        %v570 = vsel %vm569, %v566, %v568
        %572 = vst [vmem:[#allocation3 + $0x11] sm:$0x1] %v570
        %v573 = vld [vmem:[#allocation2] sm:$0x3]
        %v575 = vlaneseq
        %v576 = vshrl.u32 %v575, 7
        %v577 = vsub.s32 0, %v576
        %v578 = vrot.slane %v573, %v577
        %v579 = vlaneseq
        %v580 = vshrl.u32 %v579, 7
        %v581 = vsub.s32 1, %v580
        %v582 = vrot.slane %v573, %v581
        %583 = vrot.lane.b32.xlu0 %v578, 110
        %v584 = vpop.permute.xlu0 %583
        %585 = vrot.lane.b32.xlu0 %v582, 110
        %v586 = vpop.permute.xlu0 %585
        %vm587 = vcmask 900096
        %v588 = vsel %vm587, %v584, %v586
        %590 = vst [vmem:[#allocation3 + $0x12] sm:$0x1] %v588
        %v591 = vld [vmem:[#allocation2] sm:$0x3]
        %v593 = vlaneseq
        %v594 = vshrl.u32 %v593, 7
        %v595 = vsub.s32 0, %v594
        %v596 = vrot.slane %v591, %v595
        %v597 = vlaneseq
        %v598 = vshrl.u32 %v597, 7
        %v599 = vsub.s32 1, %v598
        %v600 = vrot.slane %v591, %v599
        %601 = vrot.lane.b32.xlu0 %v596, 109
        %v602 = vpop.permute.xlu0 %601
        %603 = vrot.lane.b32.xlu0 %v600, 109
        %v604 = vpop.permute.xlu0 %603
        %vm605 = vcmask 891904
        %v606 = vsel %vm605, %v602, %v604
        %608 = vst [vmem:[#allocation3 + $0x13] sm:$0x1] %v606
        %v609 = vld [vmem:[#allocation2] sm:$0x3]
        %v611 = vlaneseq
        %v612 = vshrl.u32 %v611, 7
        %v613 = vsub.s32 0, %v612
        %v614 = vrot.slane %v609, %v613
        %v615 = vlaneseq
        %v616 = vshrl.u32 %v615, 7
        %v617 = vsub.s32 1, %v616
        %v618 = vrot.slane %v609, %v617
        %619 = vrot.lane.b32.xlu0 %v614, 108
        %v620 = vpop.permute.xlu0 %619
        %621 = vrot.lane.b32.xlu0 %v618, 108
        %v622 = vpop.permute.xlu0 %621
        %vm623 = vcmask 883712
        %v624 = vsel %vm623, %v620, %v622
        %626 = vst [vmem:[#allocation3 + $0x14] sm:$0x1] %v624
        %v627 = vld [vmem:[#allocation2] sm:$0x3]
        %v629 = vlaneseq
        %v630 = vshrl.u32 %v629, 7
        %v631 = vsub.s32 0, %v630
        %v632 = vrot.slane %v627, %v631
        %v633 = vlaneseq
        %v634 = vshrl.u32 %v633, 7
        %v635 = vsub.s32 1, %v634
        %v636 = vrot.slane %v627, %v635
        %637 = vrot.lane.b32.xlu0 %v632, 107
        %v638 = vpop.permute.xlu0 %637
        %639 = vrot.lane.b32.xlu0 %v636, 107
        %v640 = vpop.permute.xlu0 %639
        %vm641 = vcmask 875520
        %v642 = vsel %vm641, %v638, %v640
        %644 = vst [vmem:[#allocation3 + $0x15] sm:$0x1] %v642
        %v645 = vld [vmem:[#allocation2] sm:$0x3]
        %v647 = vlaneseq
        %v648 = vshrl.u32 %v647, 7
        %v649 = vsub.s32 0, %v648
        %v650 = vrot.slane %v645, %v649
        %v651 = vlaneseq
        %v652 = vshrl.u32 %v651, 7
        %v653 = vsub.s32 1, %v652
        %v654 = vrot.slane %v645, %v653
        %655 = vrot.lane.b32.xlu0 %v650, 106
        %v656 = vpop.permute.xlu0 %655
        %657 = vrot.lane.b32.xlu0 %v654, 106
        %v658 = vpop.permute.xlu0 %657
        %vm659 = vcmask 867328
        %v660 = vsel %vm659, %v656, %v658
        %662 = vst [vmem:[#allocation3 + $0x16] sm:$0x1] %v660
        %v663 = vld [vmem:[#allocation2] sm:$0x3]
        %v665 = vlaneseq
        %v666 = vshrl.u32 %v665, 7
        %v667 = vsub.s32 0, %v666
        %v668 = vrot.slane %v663, %v667
        %v669 = vlaneseq
        %v670 = vshrl.u32 %v669, 7
        %v671 = vsub.s32 1, %v670
        %v672 = vrot.slane %v663, %v671
        %673 = vrot.lane.b32.xlu0 %v668, 105
        %v674 = vpop.permute.xlu0 %673
        %675 = vrot.lane.b32.xlu0 %v672, 105
        %v676 = vpop.permute.xlu0 %675
        %vm677 = vcmask 859136
        %v678 = vsel %vm677, %v674, %v676
        %680 = vst [vmem:[#allocation3 + $0x17] sm:$0x1] %v678
        %v681 = vld [vmem:[#allocation2] sm:$0x3]
        %v683 = vlaneseq
        %v684 = vshrl.u32 %v683, 7
        %v685 = vsub.s32 0, %v684
        %v686 = vrot.slane %v681, %v685
        %v687 = vlaneseq
        %v688 = vshrl.u32 %v687, 7
        %v689 = vsub.s32 1, %v688
        %v690 = vrot.slane %v681, %v689
        %691 = vrot.lane.b32.xlu0 %v686, 104
        %v692 = vpop.permute.xlu0 %691
        %693 = vrot.lane.b32.xlu0 %v690, 104
        %v694 = vpop.permute.xlu0 %693
        %vm695 = vcmask 850944
        %v696 = vsel %vm695, %v692, %v694
        %698 = vst [vmem:[#allocation3 + $0x18] sm:$0x1] %v696
        %v699 = vld [vmem:[#allocation2] sm:$0x3]
        %v701 = vlaneseq
        %v702 = vshrl.u32 %v701, 7
        %v703 = vsub.s32 0, %v702
        %v704 = vrot.slane %v699, %v703
        %v705 = vlaneseq
        %v706 = vshrl.u32 %v705, 7
        %v707 = vsub.s32 1, %v706
        %v708 = vrot.slane %v699, %v707
        %709 = vrot.lane.b32.xlu0 %v704, 103
        %v710 = vpop.permute.xlu0 %709
        %711 = vrot.lane.b32.xlu0 %v708, 103
        %v712 = vpop.permute.xlu0 %711
        %vm713 = vcmask 842752
        %v714 = vsel %vm713, %v710, %v712
        %716 = vst [vmem:[#allocation3 + $0x19] sm:$0x1] %v714
        %v717 = vld [vmem:[#allocation2] sm:$0x3]
        %v719 = vlaneseq
        %v720 = vshrl.u32 %v719, 7
        %v721 = vsub.s32 0, %v720
        %v722 = vrot.slane %v717, %v721
        %v723 = vlaneseq
        %v724 = vshrl.u32 %v723, 7
        %v725 = vsub.s32 1, %v724
        %v726 = vrot.slane %v717, %v725
        %727 = vrot.lane.b32.xlu0 %v722, 102
        %v728 = vpop.permute.xlu0 %727
        %729 = vrot.lane.b32.xlu0 %v726, 102
        %v730 = vpop.permute.xlu0 %729
        %vm731 = vcmask 834560
        %v732 = vsel %vm731, %v728, %v730
        %734 = vst [vmem:[#allocation3 + $0x1a] sm:$0x1] %v732
        %v735 = vld [vmem:[#allocation2] sm:$0x3]
        %v737 = vlaneseq
        %v738 = vshrl.u32 %v737, 7
        %v739 = vsub.s32 0, %v738
        %v740 = vrot.slane %v735, %v739
        %v741 = vlaneseq
        %v742 = vshrl.u32 %v741, 7
        %v743 = vsub.s32 1, %v742
        %v744 = vrot.slane %v735, %v743
        %745 = vrot.lane.b32.xlu0 %v740, 101
        %v746 = vpop.permute.xlu0 %745
        %747 = vrot.lane.b32.xlu0 %v744, 101
        %v748 = vpop.permute.xlu0 %747
        %vm749 = vcmask 826368
        %v750 = vsel %vm749, %v746, %v748
        %752 = vst [vmem:[#allocation3 + $0x1b] sm:$0x1] %v750
        %v753 = vld [vmem:[#allocation2] sm:$0x3]
        %v755 = vlaneseq
        %v756 = vshrl.u32 %v755, 7
        %v757 = vsub.s32 0, %v756
        %v758 = vrot.slane %v753, %v757
        %v759 = vlaneseq
        %v760 = vshrl.u32 %v759, 7
        %v761 = vsub.s32 1, %v760
        %v762 = vrot.slane %v753, %v761
        %763 = vrot.lane.b32.xlu0 %v758, 100
        %v764 = vpop.permute.xlu0 %763
        %765 = vrot.lane.b32.xlu0 %v762, 100
        %v766 = vpop.permute.xlu0 %765
        %vm767 = vcmask 818176
        %v768 = vsel %vm767, %v764, %v766
        %770 = vst [vmem:[#allocation3 + $0x1c] sm:$0x1] %v768
        %v771 = vld [vmem:[#allocation2] sm:$0x3]
        %v773 = vlaneseq
        %v774 = vshrl.u32 %v773, 7
        %v775 = vsub.s32 0, %v774
        %v776 = vrot.slane %v771, %v775
        %v777 = vlaneseq
        %v778 = vshrl.u32 %v777, 7
        %v779 = vsub.s32 1, %v778
        %v780 = vrot.slane %v771, %v779
        %781 = vrot.lane.b32.xlu0 %v776, 99
        %v782 = vpop.permute.xlu0 %781
        %783 = vrot.lane.b32.xlu0 %v780, 99
        %v784 = vpop.permute.xlu0 %783
        %vm785 = vcmask 809984
        %v786 = vsel %vm785, %v782, %v784
        %788 = vst [vmem:[#allocation3 + $0x1d] sm:$0x1] %v786
        %v789 = vld [vmem:[#allocation2] sm:$0x3]
        %v791 = vlaneseq
        %v792 = vshrl.u32 %v791, 7
        %v793 = vsub.s32 0, %v792
        %v794 = vrot.slane %v789, %v793
        %v795 = vlaneseq
        %v796 = vshrl.u32 %v795, 7
        %v797 = vsub.s32 1, %v796
        %v798 = vrot.slane %v789, %v797
        %799 = vrot.lane.b32.xlu0 %v794, 98
        %v800 = vpop.permute.xlu0 %799
        %801 = vrot.lane.b32.xlu0 %v798, 98
        %v802 = vpop.permute.xlu0 %801
        %vm803 = vcmask 801792
        %v804 = vsel %vm803, %v800, %v802
        %806 = vst [vmem:[#allocation3 + $0x1e] sm:$0x1] %v804
        %v807 = vld [vmem:[#allocation2] sm:$0x3]
        %v809 = vlaneseq
        %v810 = vshrl.u32 %v809, 7
        %v811 = vsub.s32 0, %v810
        %v812 = vrot.slane %v807, %v811
        %v813 = vlaneseq
        %v814 = vshrl.u32 %v813, 7
        %v815 = vsub.s32 1, %v814
        %v816 = vrot.slane %v807, %v815
        %817 = vrot.lane.b32.xlu0 %v812, 97
        %v818 = vpop.permute.xlu0 %817
        %819 = vrot.lane.b32.xlu0 %v816, 97
        %v820 = vpop.permute.xlu0 %819
        %vm821 = vcmask 793600
        %v822 = vsel %vm821, %v818, %v820
        %824 = vst [vmem:[#allocation3 + $0x1f] sm:$0x1] %v822
        %v825 = vld [vmem:[#allocation2] sm:$0x3]
        %v827 = vlaneseq
        %v828 = vshrl.u32 %v827, 7
        %v829 = vsub.s32 0, %v828
        %v830 = vrot.slane %v825, %v829
        %v831 = vlaneseq
        %v832 = vshrl.u32 %v831, 7
        %v833 = vsub.s32 1, %v832
        %v834 = vrot.slane %v825, %v833
        %835 = vrot.lane.b32.xlu0 %v830, 96
        %v836 = vpop.permute.xlu0 %835
        %837 = vrot.lane.b32.xlu0 %v834, 96
        %v838 = vpop.permute.xlu0 %837
        %vm839 = vcmask 785408
        %v840 = vsel %vm839, %v836, %v838
        %842 = vst [vmem:[#allocation3 + $0x20] sm:$0x1] %v840
        %843 = vst [vmem:[#allocation3 + $0x21] sm:$0x7f] 0.0
        %v844 = vld [vmem:[#allocation9] sm:$0xff]
        %v845 = vld [vmem:[#allocation9 + $0x8] sm:$0xff]
        %v846 = vld [vmem:[#allocation3] sm:$0xff]
        %v847 = vld [vmem:[#allocation3 + $0x8] sm:$0xff]
        %v848 = vld [vmem:[#allocation3 + $0x10] sm:$0xff]
        %v849 = vld [vmem:[#allocation3 + $0x18] sm:$0xff]
        %v850 = vld [vmem:[#allocation3 + $0x20] sm:$0xff]
        %vm851 = vcmask 326656
        %v853 = vsel %vm851, %v844, 0
        %v856 = vsel %vm851, %v845, 0
        %858 = vmatprep.subr.mxu0 0.0
        %859 = vmatpush1.msra.mxu0 0.0
        %860 = vmatprep.subr.mxu0 0.0
        %861 = vmatpush1.msra.mxu0 0.0
        %862 = vmatprep.subr.mxu0 0.0
        %863 = vmatpush1.msra.mxu0 0.0
        %864 = vmatprep.subr.mxu0 0.0
        %865 = vmatpush1.msra.mxu0 0.0
        %866 = vmatprep.subr.mxu0 0.0
        %867 = vmatpush1.msra.mxu0 0.0
        %868 = vmatprep.subr.mxu0 0.0
        %869 = vmatpush1.msra.mxu0 0.0
        %870 = vmatprep.subr.mxu0 0.0
        %871 = vmatpush1.msra.mxu0 0.0
        %872 = vmatprep.subr.mxu0 0.0
        %873 = vmatpush1.msra.mxu0 0.0
        %874 = vmatprep.subr.mxu0 0.0
        %875 = vmatpush1.msra.mxu0 0.0
        %876 = vmatprep.subr.mxu0 0.0
        %877 = vmatpush1.msra.mxu0 0.0
        %878 = vmatprep.subr.mxu0 0.0
        %879 = vmatpush1.msra.mxu0 0.0
        %880 = vmatprep.subr.mxu0 0.0
        %881 = vmatpush1.msra.mxu0 %v850
        %882 = vmatprep.subr.mxu0 0.0
        %883 = vmatpush1.msra.mxu0 %v849
        %884 = vmatprep.subr.mxu0 0.0
        %885 = vmatpush1.msra.mxu0 %v848
        %886 = vmatprep.subr.mxu0 0.0
        %887 = vmatpush1.msra.mxu0 %v847
        %888 = vmatprep.subr.mxu0 0.0
        %889 = vmatpush1.msra.mxu0 %v846
        %890 = vmatprep.subr.mxu0 0.0
        %891 = vmatpush2.msra.mxu0 0.0
        %892 = vmatprep.subr.mxu0 0.0
        %893 = vmatpush2.msra.mxu0 0.0
        %894 = vmatprep.subr.mxu0 0.0
        %895 = vmatpush2.msra.mxu0 0.0
        %896 = vmatprep.subr.mxu0 0.0
        %897 = vmatpush2.msra.mxu0 0.0
        %898 = vmatprep.subr.mxu0 0.0
        %899 = vmatpush2.msra.mxu0 0.0
        %900 = vmatprep.subr.mxu0 0.0
        %901 = vmatpush2.msra.mxu0 0.0
        %902 = vmatprep.subr.mxu0 0.0
        %903 = vmatpush2.msra.mxu0 0.0
        %904 = vmatprep.subr.mxu0 0.0
        %905 = vmatpush2.msra.mxu0 0.0
        %906 = vmatprep.subr.mxu0 0.0
        %907 = vmatpush2.msra.mxu0 0.0
        %908 = vmatprep.subr.mxu0 0.0
        %909 = vmatpush2.msra.mxu0 0.0
        %910 = vmatprep.subr.mxu0 0.0
        %911 = vmatpush2.msra.mxu0 0.0
        %912 = vmatprep.subr.mxu0 0.0
        %913 = vmatpush2.msra.mxu0 0.0
        %914 = vmatprep.subr.mxu0 0.0
        %915 = vmatpush2.msra.mxu0 0.0
        %916 = vmatprep.subr.mxu0 0.0
        %917 = vmatpush2.msra.mxu0 0.0
        %918 = vmatprep.subr.mxu0 0.0
        %919 = vmatpush2.msra.mxu0 0.0
        %920 = vmatprep.subr.mxu0 0.0
        %921 = vmatpush2.msra.mxu0 0.0
        %922 = vmatprep.mubr.f32.mxu0 0.0
        %923 = vmatmul.mubr.f32.gmra.mxu0 %v853
        %v924 = vpop.f32.mrf.mxu0
        %v925 = vadd.f32 0.0, %v924
        %v926 = vpop.f32.mrf.mxu0
        %927 = vmatprep.mubr.f32.mxu0 0.0
        %928 = vmatmul.mubr.f32.gmra.mxu0 %v856
        %v929 = vpop.f32.mrf.mxu0
        %v930 = vadd.f32 0.0, %v929
        %v931 = vpop.f32.mrf.mxu0
        %932 = vdwg.mxu0
        %933 = vst [vmem:[%s255] sm:$0xff] %v925
        %934 = vst [vmem:[%s255 + $0x8] sm:$0xff] %v930
        %s935 = sand.u32 %s124, 1
        %s936 = scalar_lea.sflag [#allocation6], %s935
        %s937 = sand.u32 %s124, 1
        %s938 = smul.addr %s937, 16
        %s939 = scalar_lea.vmem [#allocation10], %s938
        // Predicated region
        $region45: #{tpu_custom_call.1} parent=31 // pred_check
          %p940 = pneg %p134
        $region46: #{tpu_custom_call.1} parent=31 // pred_check_branch
          %942 = sbr.rel (%p940) target = $region48
        $region47: #{tpu_custom_call.1} parent=31 // pred_region
          %s944 = ssub.s32 256, 256
          %945 = vsyncadd %s936, %s944
          %s946 = smul.addr %s27, 4
          %s947 = sadd.s32 %s28, %s946
          %s948 = smul.addr %s947, 128
          %s949 = scalar_lea.hbm %s3, %s948
          %s950 = sshll.u32 %s939, 4
          %s951 = int_to_ptr.vmem [resolvable:$true] %s950
          %956 = dma.vmem_to_hbm [thread:$0]  %s951, 256, %s949, %s936, 128, 256, 8
        $region48: #{tpu_custom_call.1} parent=31 // pred_fallthru
          _
      $region32: #{tpu_custom_call.1} parent=5 // pred_fallthru
        _
      %p957 = scmp.le.s32.totalorder 2, %s18
      // Predicated region
      $region49: #{tpu_custom_call.1} parent=5 // pred_check
        %p958 = pneg %p957
      $region50: #{tpu_custom_call.1} parent=5 // pred_check_branch
        %960 = sbr.rel (%p958) target = $region52
      $region51: #{tpu_custom_call.1} parent=5 // pred_region
        %s961 = ssub.s32 %s18, 2
        // Predicated region
        $region53: #{tpu_custom_call.1} parent=51 // pred_check
          %p962 = pneg %p140
        $region54: #{tpu_custom_call.1} parent=51 // pred_check_branch
          %964 = sbr.rel (%p962) target = $region56
        $region55: #{tpu_custom_call.1} parent=51 // pred_region
          %s965 = sand.u32 %s125, 1
          %s966 = scalar_lea.sflag [#allocation6], %s965
          %s967 = sand.u32 %s125, 1
          %s968 = smul.addr %s967, 16
          %s969 = scalar_lea.vmem [#allocation10], %s968
          %970 = dma.done %s966, 256
        $region56: #{tpu_custom_call.1} parent=51 // pred_fallthru
          _
      $region52: #{tpu_custom_call.1} parent=5 // pred_fallthru
        _
    $region6: #{tpu_custom_call.1} parent=1 // loop_footer
      %s22 = sadd.s32 1, %s18
    $region7: #{tpu_custom_call.1} parent=1 // loop_footer_branch
      %17 = sbr.rel target = $region3
    $region8: #{tpu_custom_call.1} parent=1 // loop_exit
      _
    %971 = vsyncpa [#allocation5], 1
    %s972 = scalar_lea.sflag [#allocation5], 1
    %973 = vsyncpa %s972, 1
    %974 = vsyncpa [#allocation8], 1
    %s975 = scalar_lea.sflag [#allocation8], 1
    %976 = vsyncpa %s975, 1
    %977 = vsyncpa [#allocation6], 1
    %s978 = scalar_lea.sflag [#allocation6], 1
    %979 = vsyncpa %s978, 1

</llo_original>
